<compile_context>
chip_gen: v6e
topology: v6e:2x2x1
jax: 0.10.0
libtpu: 0.0.40
codegen_flags: <defaults>
</compile_context>

<pallas_src>
import functools

import jax
import jax.numpy as jnp
from jax import lax
from jax.experimental import pallas as pl
from jax.experimental.pallas import tpu as pltpu


def _round_up(x, m):
    return ((x + m - 1) // m) * m


def _cdiv(a, b):
    return -(-a // b)


# ---------------------------------------------------------------------------
# Pass 1 (stats only): y = relu(g @ W_fold + bias) in f32; write per-tile
# column sum (row 0) and sum-of-squares (row 1).  Row masking of the zero
# padded faces only happens on the last tile.
# ---------------------------------------------------------------------------
def _v2f_stats_kernel(g_ref, w_ref, b_ref, stats_ref, *, num_valid_rows,
                      tile_rows):
    tile = pl.program_id(0)

    y = jnp.dot(g_ref[...], w_ref[...], preferred_element_type=jnp.float32)
    y = jnp.maximum(y + b_ref[...], 0.0)              # bias + ReLU (f32)
    o_pad = y.shape[1]

    def write_stats(yv):
        s = jnp.sum(yv, axis=0, keepdims=True)         # [1, O_pad]
        sq = jnp.sum(yv * yv, axis=0, keepdims=True)    # [1, O_pad]
        ridx = lax.broadcasted_iota(jnp.int32, (2, o_pad), 0)
        stats_ref[...] = jnp.where(ridx == 0, s, sq)[None, :, :]

    last = pl.num_programs(0) - 1

    @pl.when(tile < last)
    def _():
        write_stats(y)

    @pl.when(tile == last)
    def _():
        # Only the last tile can contain padded face rows.
        row = tile * tile_rows + lax.broadcasted_iota(jnp.int32, y.shape, 0)
        write_stats(jnp.where(row < num_valid_rows, y, 0.0))


# ---------------------------------------------------------------------------
# Pass 2: recompute matmul + bias + ReLU and apply the folded BN affine
# (out = y * scale + shift with scale = rstd*gamma, shift = beta - mean*scale).
# ---------------------------------------------------------------------------
def _v2f_apply_kernel(g_ref, w_ref, b_ref, scale_ref, shift_ref, o_ref):
    y = jnp.dot(g_ref[...], w_ref[...], preferred_element_type=jnp.float32)
    y = jnp.maximum(y + b_ref[...], 0.0)
    o_ref[...] = y * scale_ref[...] + shift_ref[...]


def v2f_conv3d(inputs, face, spatial_weights, depth_weights, biases,
               gamma=None, beta=None, *, tile_rows=2048, eps=1e-5):
    """inputs: [V, C] f32, face: [F, 3] i32, spatial_weights: [3, C, M],
    depth_weights: [C*M, O], biases: [1, O], gamma/beta: [O] -> [F, O] f32."""
    V, C = inputs.shape
    _, _, M = spatial_weights.shape
    _, O = depth_weights.shape
    F_ = face.shape[0]

    if gamma is None:
        gamma = jnp.ones((O,), jnp.float32)
    if beta is None:
        beta = jnp.zeros((O,), jnp.float32)

    K = 3 * C                                  # contraction dim (full-block)
    O_pad = _round_up(O, 128)                  # lane-dense output / MXU N

    # --- Fold the depthwise spatial weights into the pointwise weights (exact,
    #     everything linear):  W_fold[k*C+c, o] = sum_m sw[k,c,m]*dw[c*M+m,o].
    #     Fold in f32, then cast the MXU operand to bf16.
    w_fold = jnp.einsum('kcm,cmo->kco', spatial_weights,
                        depth_weights.reshape(C, M, O)).reshape(K, O)
    w_fold = jnp.pad(w_fold, ((0, 0), (0, O_pad - O))).astype(jnp.bfloat16)
    b = jnp.pad(biases.reshape(1, O).astype(jnp.float32),
                ((0, 0), (0, O_pad - O)))

    # --- Face tile size from an explicit double-buffered VMEM budget
    #     (conservative for v7x's 64 MiB VMEM; plenty of slack on v5e/v6e).
    w_bytes = 2 * K * O_pad * 2                       # bf16 weights, 2 buffers
    vec_bytes = 2 * 3 * O_pad * 4                     # b / scale / shift
    row_bytes = 2 * (K * 2) + 2 * (O_pad * 4)         # g (bf16) + out (f32)
    budget = 24 * 1024 * 1024
    tf_cap = max(256, ((budget - w_bytes - vec_bytes) // row_bytes) // 16 * 16)
    TF = max(16, min(tile_rows, tf_cap, _round_up(F_, 16)) // 16 * 16)
    num_tiles = _cdiv(F_, TF)
    if num_tiles == 1 and F_ >= 512:
        # Keep >= 2 face tiles so both v7x TensorCores get work.
        TF = _round_up(_cdiv(F_, 2), 16)
        num_tiles = _cdiv(F_, TF)
    F_pad = num_tiles * TF

    # --- Gather the 3 vertex rows per face directly into the padded bf16
    #     operand (one fused XLA gather; padded faces reuse vertex 0 and are
    #     masked out of the statistics / sliced off the output).
    face_p = jnp.pad(face, ((0, F_pad - F_), (0, 0)))
    g = inputs.astype(jnp.bfloat16)[face_p].reshape(F_pad, K)
    # TODO(synk): for large C, gather inside the kernel instead (scalar
    #             prefetch of face indices + take/DMA from a resident inputs
    #             block) to avoid materializing g in HBM.

    cparams = pltpu.CompilerParams(
        dimension_semantics=("parallel",),
        vmem_limit_bytes=32 * 1024 * 1024)

    # --- Pass 1: streamed per-tile sum / sum-of-squares (no y round trip).
    stats = pl.pallas_call(
        functools.partial(_v2f_stats_kernel, num_valid_rows=F_, tile_rows=TF),
        out_shape=jax.ShapeDtypeStruct((num_tiles, 2, O_pad), jnp.float32),
        grid=(num_tiles,),
        in_specs=[
            pl.BlockSpec((TF, K), lambda i: (i, 0)),
            pl.BlockSpec((K, O_pad), lambda i: (0, 0)),
            pl.BlockSpec((1, O_pad), lambda i: (0, 0)),
        ],
        out_specs=pl.BlockSpec((1, 2, O_pad), lambda i: (i, 0, 0)),
        compiler_params=cparams,
    )(g, w_fold, b)

    # --- Global BatchNorm1d training-mode statistics (biased variance).
    # TODO(synk): E[y^2]-E[y]^2 can cancel for very large activation scales;
    #             switch to a shifted/centered variance if that regime matters.
    total = jnp.sum(stats[:, 0, :], axis=0)                  # [O_pad]
    total_sq = jnp.sum(stats[:, 1, :], axis=0)               # [O_pad]
    mean = total / F_
    var = jnp.maximum(total_sq / F_ - mean * mean, 0.0)
    rstd = lax.rsqrt(var + eps)
    gamma_p = jnp.pad(gamma.reshape(1, O).astype(jnp.float32),
                      ((0, 0), (0, O_pad - O)))
    beta_p = jnp.pad(beta.reshape(1, O).astype(jnp.float32),
                     ((0, 0), (0, O_pad - O)))
    scale = rstd[None, :] * gamma_p                          # [1, O_pad]
    shift = beta_p - mean[None, :] * scale                   # [1, O_pad]
    # TODO(synk): BatchNorm running-mean/var updates (training side effect that
    #             does not change this forward output) are not implemented.

    # --- Pass 2: recompute matmul+bias+ReLU, apply folded BN scale/shift.
    out = pl.pallas_call(
        _v2f_apply_kernel,
        out_shape=jax.ShapeDtypeStruct((F_pad, O_pad), jnp.float32),
        grid=(num_tiles,),
        in_specs=[
            pl.BlockSpec((TF, K), lambda i: (i, 0)),
            pl.BlockSpec((K, O_pad), lambda i: (0, 0)),
            pl.BlockSpec((1, O_pad), lambda i: (0, 0)),
            pl.BlockSpec((1, O_pad), lambda i: (0, 0)),
            pl.BlockSpec((1, O_pad), lambda i: (0, 0)),
        ],
        out_specs=pl.BlockSpec((TF, O_pad), lambda i: (i, 0)),
        compiler_params=cparams,
    )(g, w_fold, b, scale, shift)

    # Slice off the face-row and lane padding outside the kernel.
    return out[:F_, :O]


# ---------------------------------------------------------------------------
# Deterministic parameter init (matches PyTorch xavier_normal fan computation)
# ---------------------------------------------------------------------------
def _xavier_normal(key, shape):
    receptive = 1
    for d in shape[2:]:
        receptive *= d
    fan_in = shape[1] * receptive
    fan_out = shape[0] * receptive
    std = (2.0 / (fan_in + fan_out)) ** 0.5
    return std * jax.random.normal(key, shape, dtype=jnp.float32)


def _reference(inputs, face, sw, dw, b, gamma, beta, eps=1e-5, match_bf16=True):
    Fn = face.shape[0]
    C = inputs.shape[1]
    M = sw.shape[2]
    O = dw.shape[1]
    if match_bf16:
        # Same math as the kernel: folded weights, bf16 MXU operands, f32 acc.
        w_fold = jnp.einsum('kcm,cmo->kco', sw,
                            dw.reshape(C, M, O)).reshape(3 * C, O)
        g = inputs.astype(jnp.bfloat16)[face].reshape(Fn, 3 * C)
        y = jnp.dot(g, w_fold.astype(jnp.bfloat16),
                    preferred_element_type=jnp.float32) + b
    else:
        # Original (unfolded, all-f32) V2FConv3d forward path.
        x = jnp.einsum('fkc,kcm->fcm', inputs[face], sw).reshape(Fn, C * M)
        y = x @ dw + b
    y = jnp.maximum(y, 0.0)
    mean = jnp.mean(y, axis=0, keepdims=True)
    var = jnp.mean((y - mean) ** 2, axis=0, keepdims=True)   # biased variance
    out = (y - mean) * lax.rsqrt(var + eps)
    return out * gamma.reshape(1, O) + beta.reshape(1, O)


if __name__ == "__main__":
    in_channels = 4
    out_channels = 8
    multiplier = 2
    num_vertices = 64
    num_faces = 200

    key = jax.random.PRNGKey(0)
    k_x, k_f, k_sw, k_dw, k_g, k_b = jax.random.split(key, 6)

    inputs = jax.random.normal(k_x, (num_vertices, in_channels),
                               dtype=jnp.float32)
    face = jax.random.randint(k_f, (num_faces, 3), 0, num_vertices,
                              dtype=jnp.int32)

    spatial_weights = _xavier_normal(k_sw, (3, in_channels, multiplier))
    depth_weights = _xavier_normal(k_dw, (in_channels * multiplier,
                                          out_channels))
    biases = jnp.zeros((1, out_channels), dtype=jnp.float32)
    gamma = 1.0 + 0.1 * jax.random.normal(k_g, (out_channels,),
                                          dtype=jnp.float32)
    beta = 0.05 * jax.random.normal(k_b, (out_channels,), dtype=jnp.float32)

    out = v2f_conv3d(inputs, face, spatial_weights, depth_weights, biases,
                     gamma=gamma, beta=beta)
    out = jax.block_until_ready(out)

    ref_match = _reference(inputs, face, spatial_weights, depth_weights,
                           biases, gamma, beta, match_bf16=True)
    ref_f32 = _reference(inputs, face, spatial_weights, depth_weights,
                         biases, gamma, beta, match_bf16=False)

    assert out.shape == (num_faces, out_channels)
    assert jnp.allclose(out, ref_match, atol=2e-3, rtol=2e-3), \
        "mismatch vs bf16-matched JAX reference"
    assert jnp.allclose(out, ref_f32, atol=1e-1, rtol=1e-1), \
        "mismatch vs f32 JAX reference"

    print("KERNEL_OK")
</pallas_src>

<mosaic_0001>
module attributes {stable_mosaic.version = 11 : i64} {
  func.func @_v2f_stats_kernel(%arg0: i32, %arg1: memref<208x12xbf16, #tpu.memory_space<vmem>>, %arg2: memref<12x128xbf16, #tpu.memory_space<vmem>>, %arg3: memref<1x128xf32, #tpu.memory_space<vmem>>, %arg4: memref<1x2x128xf32, #tpu.memory_space<vmem>>) attributes {dimension_semantics = [#tpu.dimension_semantics<parallel>], iteration_bounds = array<i64: 1>, scalar_prefetch = 0 : i64, scratch_operands = 0 : i64, tpu.core_type = #tpu.core_type<tc>, window_params = [{transform_indices = @transform_0, window_bounds = array<i64: 208, 12>}, {pipeline_mode = #tpu.pipeline_mode<synchronous>, transform_indices = @transform_1, window_bounds = array<i64: 12, 128>}, {pipeline_mode = #tpu.pipeline_mode<synchronous>, transform_indices = @transform_2, window_bounds = array<i64: 1, 128>}, {transform_indices = @transform_3, window_bounds = array<i64: 1, 2, 128>}]} {
    %c0 = arith.constant 0 : index
    %c0_0 = arith.constant 0 : index
    %0 = vector.load %arg1[%c0, %c0_0] : memref<208x12xbf16, #tpu.memory_space<vmem>>, vector<208x12xbf16>
    %c0_1 = arith.constant 0 : index
    %c0_2 = arith.constant 0 : index
    %1 = vector.load %arg2[%c0_1, %c0_2] : memref<12x128xbf16, #tpu.memory_space<vmem>>, vector<12x128xbf16>
    %cst = arith.constant dense<0.000000e+00> : vector<208x128xf32>
    %2 = tpu.matmul %0, %1, %cst {dimension_numbers = #tpu.dot_dimension_numbers<[1], [0], [0], [1], [0, 0, 1, 1], [], []>} : vector<208x12xbf16>, vector<12x128xbf16>, vector<208x128xf32> -> vector<208x128xf32>
    %c0_3 = arith.constant 0 : index
    %c0_4 = arith.constant 0 : index
    %3 = vector.load %arg3[%c0_3, %c0_4] : memref<1x128xf32, #tpu.memory_space<vmem>>, vector<1x128xf32>
    %4 = vector.broadcast %3 : vector<1x128xf32> to vector<208x128xf32>
    %5 = arith.addf %2, %4 : vector<208x128xf32>
    %cst_5 = arith.constant 0.000000e+00 : f32
    %6 = vector.broadcast %cst_5 : f32 to vector<208x128xf32>
    %7 = arith.maximumf %5, %6 : vector<208x128xf32>
    %c0_i32 = arith.constant 0 : i32
    %8 = arith.cmpi slt, %arg0, %c0_i32 : i32
    %9 = arith.extui %8 : i1 to i32
    %c0_i32_6 = arith.constant 0 : i32
    %10 = arith.cmpi ne, %9, %c0_i32_6 : i32
    scf.if %10 {
      %cst_9 = arith.constant dense<0.000000e+00> : vector<128xf32>
      %14 = vector.multi_reduction <add>, %7, %cst_9 [0] : vector<208x128xf32> to vector<128xf32>
      %15 = vector.shape_cast %14 : vector<128xf32> to vector<1x128xf32>
      %16 = arith.mulf %7, %7 : vector<208x128xf32>
      %cst_10 = arith.constant dense<0.000000e+00> : vector<128xf32>
      %17 = vector.multi_reduction <add>, %16, %cst_10 [0] : vector<208x128xf32> to vector<128xf32>
      %18 = vector.shape_cast %17 : vector<128xf32> to vector<1x128xf32>
      %19 = tpu.iota {dimensions = array<i32: 0>} : vector<2x128xi32>
      %c0_i32_11 = arith.constant 0 : i32
      %20 = vector.broadcast %c0_i32_11 : i32 to vector<2x128xi32>
      %21 = arith.cmpi eq, %19, %20 : vector<2x128xi32>
      %22 = vector.shape_cast %15 : vector<1x128xf32> to vector<1x128xf32>
      %23 = vector.broadcast %22 : vector<1x128xf32> to vector<2x128xf32>
      %24 = vector.shape_cast %18 : vector<1x128xf32> to vector<1x128xf32>
      %25 = vector.broadcast %24 : vector<1x128xf32> to vector<2x128xf32>
      %26 = arith.select %21, %23, %25 : vector<2x128xi1>, vector<2x128xf32>
      %27 = vector.shape_cast %26 : vector<2x128xf32> to vector<1x2x128xf32>
      %c0_12 = arith.constant 0 : index
      %c0_13 = arith.constant 0 : index
      %c0_14 = arith.constant 0 : index
      %28 = vector.load %arg4[%c0_12, %c0_13, %c0_14] : memref<1x2x128xf32, #tpu.memory_space<vmem>>, vector<1x2x128xf32>
      tpu.vector_store %arg4[%c0_12, %c0_13, %c0_14], %27 {strides = array<i32>} : memref<1x2x128xf32, #tpu.memory_space<vmem>>, vector<1x2x128xf32>,
    } else {
    }
    %c0_i32_7 = arith.constant 0 : i32
    %11 = arith.cmpi eq, %arg0, %c0_i32_7 : i32
    %12 = arith.extui %11 : i1 to i32
    %c0_i32_8 = arith.constant 0 : i32
    %13 = arith.cmpi ne, %12, %c0_i32_8 : i32
    scf.if %13 {
      %c208_i32 = arith.constant 208 : i32
      %14 = arith.muli %arg0, %c208_i32 : i32
      %15 = tpu.iota {dimensions = array<i32: 0>} : vector<208x128xi32>
      %16 = vector.broadcast %14 : i32 to vector<208x128xi32>
      %17 = arith.addi %16, %15 : vector<208x128xi32>
      %c200_i32 = arith.constant 200 : i32
      %18 = vector.broadcast %c200_i32 : i32 to vector<208x128xi32>
      %19 = arith.cmpi slt, %17, %18 : vector<208x128xi32>
      %cst_9 = arith.constant 0.000000e+00 : f32
      %20 = vector.broadcast %cst_9 : f32 to vector<208x128xf32>
      %21 = arith.select %19, %7, %20 : vector<208x128xi1>, vector<208x128xf32>
      %cst_10 = arith.constant dense<0.000000e+00> : vector<128xf32>
      %22 = vector.multi_reduction <add>, %21, %cst_10 [0] : vector<208x128xf32> to vector<128xf32>
      %23 = vector.shape_cast %22 : vector<128xf32> to vector<1x128xf32>
      %24 = arith.mulf %21, %21 : vector<208x128xf32>
      %cst_11 = arith.constant dense<0.000000e+00> : vector<128xf32>
      %25 = vector.multi_reduction <add>, %24, %cst_11 [0] : vector<208x128xf32> to vector<128xf32>
      %26 = vector.shape_cast %25 : vector<128xf32> to vector<1x128xf32>
      %27 = tpu.iota {dimensions = array<i32: 0>} : vector<2x128xi32>
      %c0_i32_12 = arith.constant 0 : i32
      %28 = vector.broadcast %c0_i32_12 : i32 to vector<2x128xi32>
      %29 = arith.cmpi eq, %27, %28 : vector<2x128xi32>
      %30 = vector.shape_cast %23 : vector<1x128xf32> to vector<1x128xf32>
      %31 = vector.broadcast %30 : vector<1x128xf32> to vector<2x128xf32>
      %32 = vector.shape_cast %26 : vector<1x128xf32> to vector<1x128xf32>
      %33 = vector.broadcast %32 : vector<1x128xf32> to vector<2x128xf32>
      %34 = arith.select %29, %31, %33 : vector<2x128xi1>, vector<2x128xf32>
      %35 = vector.shape_cast %34 : vector<2x128xf32> to vector<1x2x128xf32>
      %c0_13 = arith.constant 0 : index
      %c0_14 = arith.constant 0 : index
      %c0_15 = arith.constant 0 : index
      %36 = vector.load %arg4[%c0_13, %c0_14, %c0_15] : memref<1x2x128xf32, #tpu.memory_space<vmem>>, vector<1x2x128xf32>
      tpu.vector_store %arg4[%c0_13, %c0_14, %c0_15], %35 {strides = array<i32>} : memref<1x2x128xf32, #tpu.memory_space<vmem>>, vector<1x2x128xf32>,
    } else {
    }
    return
  }
  func.func @transform_0(%arg0: i32) -> (i32, i32) {
    %c0_i32 = arith.constant 0 : i32
    %c0_i32_0 = arith.constant 0 : i32
    return %arg0, %c0_i32 : i32, i32
  }
  func.func @transform_1(%arg0: i32) -> (i32, i32) {
    %c0_i32 = arith.constant 0 : i32
    %c0_i32_0 = arith.constant 0 : i32
    %c0_i32_1 = arith.constant 0 : i32
    return %c0_i32, %c0_i32_0 : i32, i32
  }
  func.func @transform_2(%arg0: i32) -> (i32, i32) {
    %c0_i32 = arith.constant 0 : i32
    %c0_i32_0 = arith.constant 0 : i32
    %c0_i32_1 = arith.constant 0 : i32
    return %c0_i32, %c0_i32_0 : i32, i32
  }
  func.func @transform_3(%arg0: i32) -> (i32, i32, i32) {
    %c0_i32 = arith.constant 0 : i32
    %c0_i32_0 = arith.constant 0 : i32
    %c0_i32_1 = arith.constant 0 : i32
    return %arg0, %c0_i32, %c0_i32_0 : i32, i32, i32
  }
}

</mosaic_0001>

<llo_original>
// kernel: tpu_custom_call.1
$region0: #{tpu_custom_call.1}
  #allocation0 [shape = 'u32[]', space=smem, size = 0x4, offset = 0x4, fixed_abs, tag = 'smem constant byte address 0x4 - core index']
  #allocation1 [shape = 'u32[144,128]{1,0:T(1,128)}', space=vmem, size = 0x12000, scoped, tag = 'internal scratch']
  %s0 = inlined_call_operand.vmem [shape: bf16[208,12], index: 0, kind: input, shape index: {}]
  %s1 = inlined_call_operand.vmem [shape: bf16[12,128], index: 1, kind: input, shape index: {}]
  %s2 = inlined_call_operand.vmem [shape: f32[1,128], index: 2, kind: input, shape index: {}]
  %s3 = inlined_call_operand.hbm [shape: f32[1,2,128], index: 3, kind: output, shape index: {}]
  %s4 = sld [smem:[#allocation0]]
  $region30: #{tpu_custom_call.1} parent=0
    _
  %s6 = ssub.s32 1, %s4
  %s7 = scalar_select 0, %s6, %s4
  $region1: #{tpu_custom_call.1} parent=0
    #allocation2 [shape = 'u8[1024]{0}', space=vmem, size = 0x400, scoped, tag = 'output window, operand 0, single buffered']
    #allocation3 [shape = 's32[1]{0}', space=sflag, size = 0x4, scoped, tag = 'scoped memory for tpu_custom_call.1']
    %8 = vsyncpa [#allocation3], 0
    // Predicated region
    $region2: #{tpu_custom_call.1} parent=1 // pred_check
      _
    $region3: #{tpu_custom_call.1} parent=1 // pred_check_branch
      %10 = sbr.rel (0) target = $region5
    $region4: #{tpu_custom_call.1} parent=1 // pred_region
      _
    $region5: #{tpu_custom_call.1} parent=1 // pred_fallthru
      _
    // Predicated region
    $region6: #{tpu_custom_call.1} parent=1 // pred_check
      _
    $region7: #{tpu_custom_call.1} parent=1 // pred_check_branch
      %12 = sbr.rel (0) target = $region9
    $region8: #{tpu_custom_call.1} parent=1 // pred_region
      _
    $region9: #{tpu_custom_call.1} parent=1 // pred_fallthru
      _
    // Predicated region
    $region10: #{tpu_custom_call.1} parent=1 // pred_check
      _
    $region11: #{tpu_custom_call.1} parent=1 // pred_check_branch
      %14 = sbr.rel (0) target = $region13
    $region12: #{tpu_custom_call.1} parent=1 // pred_region
      _
    $region13: #{tpu_custom_call.1} parent=1 // pred_fallthru
      _
    %v16 = vld [vmem:[%s0] sm:$0xf]
    %v17 = vld [vmem:[%s0 + $0x4] sm:$0xf]
    %v18 = vld [vmem:[%s0 + $0x8] sm:$0xf]
    %v19 = vld [vmem:[%s0 + $0xc] sm:$0xf]
    %v20 = vld [vmem:[%s0 + $0x10] sm:$0xf]
    %v21 = vld [vmem:[%s0 + $0x14] sm:$0xf]
    %v22 = vld [vmem:[%s0 + $0x18] sm:$0xf]
    %v23 = vld [vmem:[%s0 + $0x1c] sm:$0xf]
    %v24 = vld [vmem:[%s0 + $0x20] sm:$0xf]
    %v25 = vld [vmem:[%s0 + $0x24] sm:$0xf]
    %v26 = vld [vmem:[%s0 + $0x28] sm:$0xf]
    %v27 = vld [vmem:[%s0 + $0x2c] sm:$0xf]
    %v28 = vld [vmem:[%s0 + $0x30] sm:$0xf]
    %v29 = vld [vmem:[%s0 + $0x34] sm:$0xf]
    %v30 = vld [vmem:[%s0 + $0x38] sm:$0xf]
    %v31 = vld [vmem:[%s0 + $0x3c] sm:$0xf]
    %v32 = vld [vmem:[%s0 + $0x40] sm:$0xf]
    %v33 = vld [vmem:[%s0 + $0x44] sm:$0xf]
    %v34 = vld [vmem:[%s0 + $0x48] sm:$0xf]
    %v35 = vld [vmem:[%s0 + $0x4c] sm:$0xf]
    %v36 = vld [vmem:[%s0 + $0x50] sm:$0xf]
    %v37 = vld [vmem:[%s0 + $0x54] sm:$0xf]
    %v38 = vld [vmem:[%s0 + $0x58] sm:$0xf]
    %v39 = vld [vmem:[%s0 + $0x5c] sm:$0xf]
    %v40 = vld [vmem:[%s0 + $0x60] sm:$0xf]
    %v41 = vld [vmem:[%s0 + $0x64] sm:$0xf]
    %v42 = vld [vmem:[%s1] sm:$0xf]
    %v43 = vld [vmem:[%s1 + $0x4] sm:$0x3]
    %v44 = vld [vmem:[%s2] sm:$0x1]
    %v46 = vlaneseq
    %v47 = vshrl.u32 %v46, 7
    %v48 = vsub.s32 0, %v47
    %v49 = vrot.slane %v44, %v48
    %v77 = vunpack.c.l.b16 %v16
    %v78 = vunpack.c.l.b16 %v17
    %v79 = vunpack.c.l.b16 %v18
    %v80 = vunpack.c.l.b16 %v19
    %v81 = vunpack.c.l.b16 %v20
    %v82 = vunpack.c.l.b16 %v21
    %v83 = vunpack.c.l.b16 %v22
    %v84 = vunpack.c.l.b16 %v23
    %v85 = vunpack.c.l.b16 %v24
    %v86 = vunpack.c.l.b16 %v25
    %v87 = vunpack.c.l.b16 %v26
    %v88 = vunpack.c.l.b16 %v27
    %v89 = vunpack.c.l.b16 %v28
    %v90 = vunpack.c.l.b16 %v29
    %v91 = vunpack.c.l.b16 %v30
    %v92 = vunpack.c.l.b16 %v31
    %v93 = vunpack.c.l.b16 %v32
    %v94 = vunpack.c.l.b16 %v33
    %v95 = vunpack.c.l.b16 %v34
    %v96 = vunpack.c.l.b16 %v35
    %v97 = vunpack.c.l.b16 %v36
    %v98 = vunpack.c.l.b16 %v37
    %v99 = vunpack.c.l.b16 %v38
    %v100 = vunpack.c.l.b16 %v39
    %v101 = vunpack.c.l.b16 %v40
    %v102 = vunpack.c.l.b16 %v41
    %v103 = vpack.c.b16 %v78, %v77
    %v104 = vpack.c.b16 %v80, %v79
    %v105 = vpack.c.b16 %v82, %v81
    %v106 = vpack.c.b16 %v84, %v83
    %v107 = vpack.c.b16 %v86, %v85
    %v108 = vpack.c.b16 %v88, %v87
    %v109 = vpack.c.b16 %v90, %v89
    %v110 = vpack.c.b16 %v92, %v91
    %v111 = vpack.c.b16 %v94, %v93
    %v112 = vpack.c.b16 %v96, %v95
    %v113 = vpack.c.b16 %v98, %v97
    %v114 = vpack.c.b16 %v100, %v99
    %v115 = vpack.c.b16 %v102, %v101
    %v118 = vunpack.c.l.b16 %v42
    %v119 = vunpack.c.l.b16 %v43
    %v120 = vpack.c.b16 %v119, %v118
    %vm121 = vcmask 97280
    %v123 = vsel %vm121, %v103, 0
    %v126 = vsel %vm121, %v104, 0
    %v129 = vsel %vm121, %v105, 0
    %v132 = vsel %vm121, %v106, 0
    %v135 = vsel %vm121, %v107, 0
    %v138 = vsel %vm121, %v108, 0
    %v141 = vsel %vm121, %v109, 0
    %v144 = vsel %vm121, %v110, 0
    %v147 = vsel %vm121, %v111, 0
    %v150 = vsel %vm121, %v112, 0
    %v153 = vsel %vm121, %v113, 0
    %v156 = vsel %vm121, %v114, 0
    %v159 = vsel %vm121, %v115, 0
    %vm161 = vcmask 1045504
    %v163 = vsel %vm161, %v120, 0
    %165 = vmatprep.subr.bf16.mxu0 0
    %166 = vmatpush1.bf16.msra.mxu0 0
    %167 = vmatprep.subr.bf16.mxu0 0
    %168 = vmatpush1.bf16.msra.mxu0 0
    %169 = vmatprep.subr.bf16.mxu0 0
    %170 = vmatpush1.bf16.msra.mxu0 0
    %171 = vmatprep.subr.bf16.mxu0 0
    %172 = vmatpush1.bf16.msra.mxu0 0
    %173 = vmatprep.subr.bf16.mxu0 0
    %174 = vmatpush1.bf16.msra.mxu0 0
    %175 = vmatprep.subr.bf16.mxu0 0
    %176 = vmatpush1.bf16.msra.mxu0 0
    %177 = vmatprep.subr.bf16.mxu0 0
    %178 = vmatpush1.bf16.msra.mxu0 0
    %179 = vmatprep.subr.bf16.mxu0 0
    %180 = vmatpush1.bf16.msra.mxu0 %v163
    %181 = vmatprep.subr.bf16.mxu0 0
    %182 = vmatpush2.bf16.msra.mxu0 0
    %183 = vmatprep.subr.bf16.mxu0 0
    %184 = vmatpush2.bf16.msra.mxu0 0
    %185 = vmatprep.subr.bf16.mxu0 0
    %186 = vmatpush2.bf16.msra.mxu0 0
    %187 = vmatprep.subr.bf16.mxu0 0
    %188 = vmatpush2.bf16.msra.mxu0 0
    %189 = vmatprep.subr.bf16.mxu0 0
    %190 = vmatpush2.bf16.msra.mxu0 0
    %191 = vmatprep.subr.bf16.mxu0 0
    %192 = vmatpush2.bf16.msra.mxu0 0
    %193 = vmatprep.subr.bf16.mxu0 0
    %194 = vmatpush2.bf16.msra.mxu0 0
    %195 = vmatprep.subr.bf16.mxu0 0
    %196 = vmatpush2.bf16.msra.mxu0 0
    %197 = vmatprep.mubr.bf16.mxu0 0
    %198 = vmatmul.mubr.bf16.gmra.mxu0 %v123
    %v199 = vpop.f32.mrf.mxu0
    %v200 = vadd.f32 %v49, %v199
    %v201 = vpop.f32.mrf.mxu0
    %v202 = vpop.f32.mrf.mxu0
    %v203 = vadd.f32 %v49, %v202
    %v204 = vpop.f32.mrf.mxu0
    %205 = vmatprep.mubr.bf16.mxu0 0
    %206 = vmatmul.mubr.bf16.gmra.mxu0 %v126
    %v207 = vpop.f32.mrf.mxu0
    %v208 = vadd.f32 %v49, %v207
    %v209 = vpop.f32.mrf.mxu0
    %v210 = vpop.f32.mrf.mxu0
    %v211 = vadd.f32 %v49, %v210
    %v212 = vpop.f32.mrf.mxu0
    %213 = vmatprep.mubr.bf16.mxu0 0
    %214 = vmatmul.mubr.bf16.gmra.mxu0 %v129
    %v215 = vpop.f32.mrf.mxu0
    %v216 = vadd.f32 %v49, %v215
    %v217 = vpop.f32.mrf.mxu0
    %v218 = vpop.f32.mrf.mxu0
    %v219 = vadd.f32 %v49, %v218
    %v220 = vpop.f32.mrf.mxu0
    %221 = vmatprep.mubr.bf16.mxu0 0
    %222 = vmatmul.mubr.bf16.gmra.mxu0 %v132
    %v223 = vpop.f32.mrf.mxu0
    %v224 = vadd.f32 %v49, %v223
    %v225 = vpop.f32.mrf.mxu0
    %v226 = vpop.f32.mrf.mxu0
    %v227 = vadd.f32 %v49, %v226
    %v228 = vpop.f32.mrf.mxu0
    %229 = vmatprep.mubr.bf16.mxu0 0
    %230 = vmatmul.mubr.bf16.gmra.mxu0 %v135
    %v231 = vpop.f32.mrf.mxu0
    %v232 = vadd.f32 %v49, %v231
    %v233 = vpop.f32.mrf.mxu0
    %v234 = vpop.f32.mrf.mxu0
    %v235 = vadd.f32 %v49, %v234
    %v236 = vpop.f32.mrf.mxu0
    %237 = vmatprep.mubr.bf16.mxu0 0
    %238 = vmatmul.mubr.bf16.gmra.mxu0 %v138
    %v239 = vpop.f32.mrf.mxu0
    %v240 = vadd.f32 %v49, %v239
    %v241 = vpop.f32.mrf.mxu0
    %v242 = vpop.f32.mrf.mxu0
    %v243 = vadd.f32 %v49, %v242
    %v244 = vpop.f32.mrf.mxu0
    %245 = vmatprep.mubr.bf16.mxu0 0
    %246 = vmatmul.mubr.bf16.gmra.mxu0 %v141
    %v247 = vpop.f32.mrf.mxu0
    %v248 = vadd.f32 %v49, %v247
    %v249 = vpop.f32.mrf.mxu0
    %v250 = vpop.f32.mrf.mxu0
    %v251 = vadd.f32 %v49, %v250
    %v252 = vpop.f32.mrf.mxu0
    %253 = vmatprep.mubr.bf16.mxu0 0
    %254 = vmatmul.mubr.bf16.gmra.mxu0 %v144
    %v255 = vpop.f32.mrf.mxu0
    %v256 = vadd.f32 %v49, %v255
    %v257 = vpop.f32.mrf.mxu0
    %v258 = vpop.f32.mrf.mxu0
    %v259 = vadd.f32 %v49, %v258
    %v260 = vpop.f32.mrf.mxu0
    %261 = vmatprep.mubr.bf16.mxu0 0
    %262 = vmatmul.mubr.bf16.gmra.mxu0 %v147
    %v263 = vpop.f32.mrf.mxu0
    %v264 = vadd.f32 %v49, %v263
    %v265 = vpop.f32.mrf.mxu0
    %v266 = vpop.f32.mrf.mxu0
    %v267 = vadd.f32 %v49, %v266
    %v268 = vpop.f32.mrf.mxu0
    %269 = vmatprep.mubr.bf16.mxu0 0
    %270 = vmatmul.mubr.bf16.gmra.mxu0 %v150
    %v271 = vpop.f32.mrf.mxu0
    %v272 = vadd.f32 %v49, %v271
    %v273 = vpop.f32.mrf.mxu0
    %v274 = vpop.f32.mrf.mxu0
    %v275 = vadd.f32 %v49, %v274
    %v276 = vpop.f32.mrf.mxu0
    %277 = vmatprep.mubr.bf16.mxu0 0
    %278 = vmatmul.mubr.bf16.gmra.mxu0 %v153
    %v279 = vpop.f32.mrf.mxu0
    %v280 = vadd.f32 %v49, %v279
    %v281 = vpop.f32.mrf.mxu0
    %v282 = vpop.f32.mrf.mxu0
    %v283 = vadd.f32 %v49, %v282
    %v284 = vpop.f32.mrf.mxu0
    %285 = vmatprep.mubr.bf16.mxu0 0
    %286 = vmatmul.mubr.bf16.gmra.mxu0 %v156
    %v287 = vpop.f32.mrf.mxu0
    %v288 = vadd.f32 %v49, %v287
    %v289 = vpop.f32.mrf.mxu0
    %v290 = vpop.f32.mrf.mxu0
    %v291 = vadd.f32 %v49, %v290
    %v292 = vpop.f32.mrf.mxu0
    %293 = vmatprep.mubr.bf16.mxu0 0
    %294 = vmatmul.mubr.bf16.gmra.mxu0 %v159
    %v295 = vpop.f32.mrf.mxu0
    %v296 = vadd.f32 %v49, %v295
    %v297 = vpop.f32.mrf.mxu0
    %v298 = vpop.f32.mrf.mxu0
    %v299 = vadd.f32 %v49, %v298
    %v300 = vpop.f32.mrf.mxu0
    %301 = vdwg.mxu0
    %v302 = vmax.f32 %v200, 0.0
    %v303 = vmax.f32 %v203, 0.0
    %v304 = vmax.f32 %v208, 0.0
    %v305 = vmax.f32 %v211, 0.0
    %v306 = vmax.f32 %v216, 0.0
    %v307 = vmax.f32 %v219, 0.0
    %v308 = vmax.f32 %v224, 0.0
    %v309 = vmax.f32 %v227, 0.0
    %v310 = vmax.f32 %v232, 0.0
    %v311 = vmax.f32 %v235, 0.0
    %v312 = vmax.f32 %v240, 0.0
    %v313 = vmax.f32 %v243, 0.0
    %v314 = vmax.f32 %v248, 0.0
    %v315 = vmax.f32 %v251, 0.0
    %v316 = vmax.f32 %v256, 0.0
    %v317 = vmax.f32 %v259, 0.0
    %v318 = vmax.f32 %v264, 0.0
    %v319 = vmax.f32 %v267, 0.0
    %v320 = vmax.f32 %v272, 0.0
    %v321 = vmax.f32 %v275, 0.0
    %v322 = vmax.f32 %v280, 0.0
    %v323 = vmax.f32 %v283, 0.0
    %v324 = vmax.f32 %v288, 0.0
    %v325 = vmax.f32 %v291, 0.0
    %v326 = vmax.f32 %v296, 0.0
    %v327 = vmax.f32 %v299, 0.0
    %p328 = scmp.lt.s32.totalorder 0, 0
    // Predicated region
    $region14: #{tpu_custom_call.1} parent=1 // pred_check
      %p329 = pneg %p328
    $region15: #{tpu_custom_call.1} parent=1 // pred_check_branch
      %331 = sbr.rel (%p329) target = $region17
    $region16: #{tpu_custom_call.1} parent=1 // pred_region
      %v332 = vadd.f32 %v302, %v303
      %v333 = vadd.f32 %v332, %v304
      %v334 = vadd.f32 %v333, %v305
      %v335 = vadd.f32 %v334, %v306
      %v336 = vadd.f32 %v335, %v307
      %v337 = vadd.f32 %v336, %v308
      %v338 = vadd.f32 %v337, %v309
      %v339 = vadd.f32 %v338, %v310
      %v340 = vadd.f32 %v339, %v311
      %v341 = vadd.f32 %v340, %v312
      %v342 = vadd.f32 %v341, %v313
      %v343 = vadd.f32 %v342, %v314
      %v344 = vadd.f32 %v343, %v315
      %v345 = vadd.f32 %v344, %v316
      %v346 = vadd.f32 %v345, %v317
      %v347 = vadd.f32 %v346, %v318
      %v348 = vadd.f32 %v347, %v319
      %v349 = vadd.f32 %v348, %v320
      %v350 = vadd.f32 %v349, %v321
      %v351 = vadd.f32 %v350, %v322
      %v352 = vadd.f32 %v351, %v323
      %v353 = vadd.f32 %v352, %v324
      %v354 = vadd.f32 %v353, %v325
      %v355 = vadd.f32 %v354, %v326
      %v356 = vadd.f32 %v355, %v327
      %v357 = vrot.slane %v356, 4
      %v358 = vadd.f32 %v356, %v357
      %v359 = vrot.slane %v358, 2
      %v360 = vadd.f32 %v358, %v359
      %v361 = vrot.slane %v360, 1
      %v362 = vadd.f32 %v360, %v361
      %v363 = vmul.f32 %v302, %v302
      %v364 = vmul.f32 %v303, %v303
      %v365 = vmul.f32 %v304, %v304
      %v366 = vmul.f32 %v305, %v305
      %v367 = vmul.f32 %v306, %v306
      %v368 = vmul.f32 %v307, %v307
      %v369 = vmul.f32 %v308, %v308
      %v370 = vmul.f32 %v309, %v309
      %v371 = vmul.f32 %v310, %v310
      %v372 = vmul.f32 %v311, %v311
      %v373 = vmul.f32 %v312, %v312
      %v374 = vmul.f32 %v313, %v313
      %v375 = vmul.f32 %v314, %v314
      %v376 = vmul.f32 %v315, %v315
      %v377 = vmul.f32 %v316, %v316
      %v378 = vmul.f32 %v317, %v317
      %v379 = vmul.f32 %v318, %v318
      %v380 = vmul.f32 %v319, %v319
      %v381 = vmul.f32 %v320, %v320
      %v382 = vmul.f32 %v321, %v321
      %v383 = vmul.f32 %v322, %v322
      %v384 = vmul.f32 %v323, %v323
      %v385 = vmul.f32 %v324, %v324
      %v386 = vmul.f32 %v325, %v325
      %v387 = vmul.f32 %v326, %v326
      %v388 = vmul.f32 %v327, %v327
      %v389 = vadd.f32 %v363, %v364
      %v390 = vadd.f32 %v389, %v365
      %v391 = vadd.f32 %v390, %v366
      %v392 = vadd.f32 %v391, %v367
      %v393 = vadd.f32 %v392, %v368
      %v394 = vadd.f32 %v393, %v369
      %v395 = vadd.f32 %v394, %v370
      %v396 = vadd.f32 %v395, %v371
      %v397 = vadd.f32 %v396, %v372
      %v398 = vadd.f32 %v397, %v373
      %v399 = vadd.f32 %v398, %v374
      %v400 = vadd.f32 %v399, %v375
      %v401 = vadd.f32 %v400, %v376
      %v402 = vadd.f32 %v401, %v377
      %v403 = vadd.f32 %v402, %v378
      %v404 = vadd.f32 %v403, %v379
      %v405 = vadd.f32 %v404, %v380
      %v406 = vadd.f32 %v405, %v381
      %v407 = vadd.f32 %v406, %v382
      %v408 = vadd.f32 %v407, %v383
      %v409 = vadd.f32 %v408, %v384
      %v410 = vadd.f32 %v409, %v385
      %v411 = vadd.f32 %v410, %v386
      %v412 = vadd.f32 %v411, %v387
      %v413 = vadd.f32 %v412, %v388
      %v414 = vrot.slane %v413, 4
      %v415 = vadd.f32 %v413, %v414
      %v416 = vrot.slane %v415, 2
      %v417 = vadd.f32 %v415, %v416
      %v418 = vrot.slane %v417, 1
      %v419 = vadd.f32 %v417, %v418
      %v420 = vlaneseq
      %v421 = vshrl.u32 %v420, 7
      %vm422 = vcmp.eq.s32.totalorder %v421, 0
      %v423 = vsel %vm422, %v362, %v419
      %424 = vst [vmem:[#allocation2] sm:$0x3] %v423
    $region17: #{tpu_custom_call.1} parent=1 // pred_fallthru
      _
    %p425 = scmp.eq.s32.totalorder 0, 0
    // Predicated region
    $region18: #{tpu_custom_call.1} parent=1 // pred_check
      %p426 = pneg %p425
    $region19: #{tpu_custom_call.1} parent=1 // pred_check_branch
      %428 = sbr.rel (%p426) target = $region21
    $region20: #{tpu_custom_call.1} parent=1 // pred_region
      %s429 = smul.u32 0, 208
      %v430 = vlaneseq
      %v431 = vshrl.u32 %v430, 7
      %v432 = vadd.s32 %v431, 8
      %v433 = vadd.s32 %v431, 16
      %v434 = vadd.s32 %v431, 24
      %v435 = vadd.s32 %v431, 32
      %v436 = vadd.s32 %v431, 40
      %v437 = vadd.s32 %v431, 48
      %v438 = vadd.s32 %v431, 56
      %v439 = vadd.s32 %v431, 64
      %v440 = vadd.s32 %v431, 72
      %v441 = vadd.s32 %v431, 80
      %v442 = vadd.s32 %v431, 88
      %v443 = vadd.s32 %v431, 96
      %v444 = vadd.s32 %v431, 104
      %v445 = vadd.s32 %v431, 112
      %v446 = vadd.s32 %v431, 120
      %v447 = vadd.s32 %v431, 128
      %v448 = vadd.s32 %v431, 136
      %v449 = vadd.s32 %v431, 144
      %v450 = vadd.s32 %v431, 152
      %v451 = vadd.s32 %v431, 160
      %v452 = vadd.s32 %v431, 168
      %v453 = vadd.s32 %v431, 176
      %v454 = vadd.s32 %v431, 184
      %v455 = vadd.s32 %v431, 192
      %v456 = vadd.s32 %v431, 200
      %v457 = vstv %s429
      %v458 = vadd.s32 %v457, %v431
      %v459 = vadd.s32 %v457, %v432
      %v460 = vadd.s32 %v457, %v433
      %v461 = vadd.s32 %v457, %v434
      %v462 = vadd.s32 %v457, %v435
      %v463 = vadd.s32 %v457, %v436
      %v464 = vadd.s32 %v457, %v437
      %v465 = vadd.s32 %v457, %v438
      %v466 = vadd.s32 %v457, %v439
      %v467 = vadd.s32 %v457, %v440
      %v468 = vadd.s32 %v457, %v441
      %v469 = vadd.s32 %v457, %v442
      %v470 = vadd.s32 %v457, %v443
      %v471 = vadd.s32 %v457, %v444
      %v472 = vadd.s32 %v457, %v445
      %v473 = vadd.s32 %v457, %v446
      %v474 = vadd.s32 %v457, %v447
      %v475 = vadd.s32 %v457, %v448
      %v476 = vadd.s32 %v457, %v449
      %v477 = vadd.s32 %v457, %v450
      %v478 = vadd.s32 %v457, %v451
      %v479 = vadd.s32 %v457, %v452
      %v480 = vadd.s32 %v457, %v453
      %v481 = vadd.s32 %v457, %v454
      %v482 = vadd.s32 %v457, %v455
      %v483 = vadd.s32 %v457, %v456
      %vm484 = vcmp.lt.s32.totalorder %v458, 200
      %vm485 = vcmp.lt.s32.totalorder %v459, 200
      %vm486 = vcmp.lt.s32.totalorder %v460, 200
      %vm487 = vcmp.lt.s32.totalorder %v461, 200
      %vm488 = vcmp.lt.s32.totalorder %v462, 200
      %vm489 = vcmp.lt.s32.totalorder %v463, 200
      %vm490 = vcmp.lt.s32.totalorder %v464, 200
      %vm491 = vcmp.lt.s32.totalorder %v465, 200
      %vm492 = vcmp.lt.s32.totalorder %v466, 200
      %vm493 = vcmp.lt.s32.totalorder %v467, 200
      %vm494 = vcmp.lt.s32.totalorder %v468, 200
      %vm495 = vcmp.lt.s32.totalorder %v469, 200
      %vm496 = vcmp.lt.s32.totalorder %v470, 200
      %vm497 = vcmp.lt.s32.totalorder %v471, 200
      %vm498 = vcmp.lt.s32.totalorder %v472, 200
      %vm499 = vcmp.lt.s32.totalorder %v473, 200
      %vm500 = vcmp.lt.s32.totalorder %v474, 200
      %vm501 = vcmp.lt.s32.totalorder %v475, 200
      %vm502 = vcmp.lt.s32.totalorder %v476, 200
      %vm503 = vcmp.lt.s32.totalorder %v477, 200
      %vm504 = vcmp.lt.s32.totalorder %v478, 200
      %vm505 = vcmp.lt.s32.totalorder %v479, 200
      %vm506 = vcmp.lt.s32.totalorder %v480, 200
      %vm507 = vcmp.lt.s32.totalorder %v481, 200
      %vm508 = vcmp.lt.s32.totalorder %v482, 200
      %vm509 = vcmp.lt.s32.totalorder %v483, 200
      %v510 = vsel %vm484, %v302, 0.0
      %v511 = vsel %vm485, %v303, 0.0
      %v512 = vsel %vm486, %v304, 0.0
      %v513 = vsel %vm487, %v305, 0.0
      %v514 = vsel %vm488, %v306, 0.0
      %v515 = vsel %vm489, %v307, 0.0
      %v516 = vsel %vm490, %v308, 0.0
      %v517 = vsel %vm491, %v309, 0.0
      %v518 = vsel %vm492, %v310, 0.0
      %v519 = vsel %vm493, %v311, 0.0
      %v520 = vsel %vm494, %v312, 0.0
      %v521 = vsel %vm495, %v313, 0.0
      %v522 = vsel %vm496, %v314, 0.0
      %v523 = vsel %vm497, %v315, 0.0
      %v524 = vsel %vm498, %v316, 0.0
      %v525 = vsel %vm499, %v317, 0.0
      %v526 = vsel %vm500, %v318, 0.0
      %v527 = vsel %vm501, %v319, 0.0
      %v528 = vsel %vm502, %v320, 0.0
      %v529 = vsel %vm503, %v321, 0.0
      %v530 = vsel %vm504, %v322, 0.0
      %v531 = vsel %vm505, %v323, 0.0
      %v532 = vsel %vm506, %v324, 0.0
      %v533 = vsel %vm507, %v325, 0.0
      %v534 = vsel %vm508, %v326, 0.0
      %v535 = vsel %vm509, %v327, 0.0
      %v536 = vadd.f32 %v510, %v511
      %v537 = vadd.f32 %v536, %v512
      %v538 = vadd.f32 %v537, %v513
      %v539 = vadd.f32 %v538, %v514
      %v540 = vadd.f32 %v539, %v515
      %v541 = vadd.f32 %v540, %v516
      %v542 = vadd.f32 %v541, %v517
      %v543 = vadd.f32 %v542, %v518
      %v544 = vadd.f32 %v543, %v519
      %v545 = vadd.f32 %v544, %v520
      %v546 = vadd.f32 %v545, %v521
      %v547 = vadd.f32 %v546, %v522
      %v548 = vadd.f32 %v547, %v523
      %v549 = vadd.f32 %v548, %v524
      %v550 = vadd.f32 %v549, %v525
      %v551 = vadd.f32 %v550, %v526
      %v552 = vadd.f32 %v551, %v527
      %v553 = vadd.f32 %v552, %v528
      %v554 = vadd.f32 %v553, %v529
      %v555 = vadd.f32 %v554, %v530
      %v556 = vadd.f32 %v555, %v531
      %v557 = vadd.f32 %v556, %v532
      %v558 = vadd.f32 %v557, %v533
      %v559 = vadd.f32 %v558, %v534
      %v560 = vadd.f32 %v559, %v535
      %v561 = vrot.slane %v560, 4
      %v562 = vadd.f32 %v560, %v561
      %v563 = vrot.slane %v562, 2
      %v564 = vadd.f32 %v562, %v563
      %v565 = vrot.slane %v564, 1
      %v566 = vadd.f32 %v564, %v565
      %v567 = vmul.f32 %v510, %v510
      %v568 = vmul.f32 %v511, %v511
      %v569 = vmul.f32 %v512, %v512
      %v570 = vmul.f32 %v513, %v513
      %v571 = vmul.f32 %v514, %v514
      %v572 = vmul.f32 %v515, %v515
      %v573 = vmul.f32 %v516, %v516
      %v574 = vmul.f32 %v517, %v517
      %v575 = vmul.f32 %v518, %v518
      %v576 = vmul.f32 %v519, %v519
      %v577 = vmul.f32 %v520, %v520
      %v578 = vmul.f32 %v521, %v521
      %v579 = vmul.f32 %v522, %v522
      %v580 = vmul.f32 %v523, %v523
      %v581 = vmul.f32 %v524, %v524
      %v582 = vmul.f32 %v525, %v525
      %v583 = vmul.f32 %v526, %v526
      %v584 = vmul.f32 %v527, %v527
      %v585 = vmul.f32 %v528, %v528
      %v586 = vmul.f32 %v529, %v529
      %v587 = vmul.f32 %v530, %v530
      %v588 = vmul.f32 %v531, %v531
      %v589 = vmul.f32 %v532, %v532
      %v590 = vmul.f32 %v533, %v533
      %v591 = vmul.f32 %v534, %v534
      %v592 = vmul.f32 %v535, %v535
      %v593 = vadd.f32 %v567, %v568
      %v594 = vadd.f32 %v593, %v569
      %v595 = vadd.f32 %v594, %v570
      %v596 = vadd.f32 %v595, %v571
      %v597 = vadd.f32 %v596, %v572
      %v598 = vadd.f32 %v597, %v573
      %v599 = vadd.f32 %v598, %v574
      %v600 = vadd.f32 %v599, %v575
      %v601 = vadd.f32 %v600, %v576
      %v602 = vadd.f32 %v601, %v577
      %v603 = vadd.f32 %v602, %v578
      %v604 = vadd.f32 %v603, %v579
      %v605 = vadd.f32 %v604, %v580
      %v606 = vadd.f32 %v605, %v581
      %v607 = vadd.f32 %v606, %v582
      %v608 = vadd.f32 %v607, %v583
      %v609 = vadd.f32 %v608, %v584
      %v610 = vadd.f32 %v609, %v585
      %v611 = vadd.f32 %v610, %v586
      %v612 = vadd.f32 %v611, %v587
      %v613 = vadd.f32 %v612, %v588
      %v614 = vadd.f32 %v613, %v589
      %v615 = vadd.f32 %v614, %v590
      %v616 = vadd.f32 %v615, %v591
      %v617 = vadd.f32 %v616, %v592
      %v618 = vrot.slane %v617, 4
      %v619 = vadd.f32 %v617, %v618
      %v620 = vrot.slane %v619, 2
      %v621 = vadd.f32 %v619, %v620
      %v622 = vrot.slane %v621, 1
      %v623 = vadd.f32 %v621, %v622
      %vm624 = vcmp.eq.s32.totalorder %v431, 0
      %v625 = vsel %vm624, %v566, %v623
      %626 = vst [vmem:[#allocation2] sm:$0x3] %v625
    $region21: #{tpu_custom_call.1} parent=1 // pred_fallthru
      _
    // Predicated region
    $region22: #{tpu_custom_call.1} parent=1 // pred_check
      _
    $region23: #{tpu_custom_call.1} parent=1 // pred_check_branch
      %628 = sbr.rel (0) target = $region25
    $region24: #{tpu_custom_call.1} parent=1 // pred_region
      %s630 = ssub.s32 32, 32
      %631 = vsyncadd [#allocation3], %s630
      %s633 = sshll.u32 [#allocation2], 4
      %s634 = int_to_ptr.vmem [resolvable:$true] %s633
      %636 = dma.vmem_to_hbm [thread:$0]  %s634, 32, %s3, [#allocation3]
    $region25: #{tpu_custom_call.1} parent=1 // pred_fallthru
      _
    // Predicated region
    $region26: #{tpu_custom_call.1} parent=1 // pred_check
      _
    $region27: #{tpu_custom_call.1} parent=1 // pred_check_branch
      %638 = sbr.rel (0) target = $region29
    $region28: #{tpu_custom_call.1} parent=1 // pred_region
      %639 = dma.done [#allocation3], 32
    $region29: #{tpu_custom_call.1} parent=1 // pred_fallthru
      _
    %640 = vsyncpa [#allocation3], 1

</llo_original>
